<compile_context>
chip_gen: v6e
topology: v6e:2x2x1
jax: 0.10.0
libtpu: 0.0.40
codegen_flags: <defaults>
</compile_context>

<pallas_src>
import jax
import jax.numpy as jnp
from jax.experimental import pallas as pl
from jax.experimental.pallas import tpu as pltpu

IN_FEATURES = 784       # 28 * 28
OUT_FEATURES = 10
OUT_PAD = 128           # lane-dense padded width used for the matmul/softmax
NEG_BIG = -1.0e9        # bias padding -> exp underflows to exactly 0 in f32
MAX_TB = 2048           # row-tile cap (f32 x tile = 6.4 MB, x2 double buffers)


def _round_up(x, m):
    return (x + m - 1) // m * m


def netlin_kernel(x_ref, w_ref, b_ref, o_ref):
    # x_ref: (TB, 784) f32   w_ref: (784, 128) bf16
    # b_ref: (1, 128)  f32   o_ref: (TB, 10)   f32
    #
    # Cast x to bf16 in-kernel (VPU work, hidden under the HBM DMA); accumulate
    # in f32 on the MXU.
    x_bf = x_ref[...].astype(jnp.bfloat16)
    logits = jnp.dot(x_bf, w_ref[...],
                     preferred_element_type=jnp.float32) + b_ref[...]

    # Numerically-stable log_softmax along the last (padded, 128-wide) axis.
    # Padded columns have logits ~ -1e9, so exp(shifted) is exactly 0 there and
    # the first 10 columns are the correct 10-class log-probabilities.
    m = jnp.max(logits, axis=-1, keepdims=True)
    shifted = logits - m
    lse = jnp.log(jnp.sum(jnp.exp(shifted), axis=-1, keepdims=True))

    # Only the 10 real classes are written back to HBM.
    o_ref[...] = (shifted - lse)[:, :OUT_FEATURES].astype(o_ref.dtype)


def prepare_params(w, b):
    """One-time lane-dense padding of the tiny weight/bias (~200 KB)."""
    w_pad = jnp.pad(w, ((0, 0), (0, OUT_PAD - OUT_FEATURES))).astype(jnp.bfloat16)
    b_pad = jnp.concatenate(
        [b.astype(jnp.float32),
         jnp.full((OUT_PAD - OUT_FEATURES,), NEG_BIG, jnp.float32)]
    ).reshape(1, OUT_PAD)
    return w_pad, b_pad


@jax.jit
def netlin_forward(x, w_pad, b_pad):
    """x: (B, 1, 28, 28) float32 -> (B, 10) float32 log-probs."""
    batch = x.shape[0]
    x2d = x.reshape(batch, IN_FEATURES)          # stays f32; cast is in-kernel

    # Large row tiles amortize the ~0.35 us per-step overhead.  For batches
    # larger than one tile, keep >= 2 grid steps so the "parallel" axis can be
    # sharded across both v7x TensorCores (each with its own HBM path).
    tb = min(MAX_TB, _round_up(batch, 8))
    if batch > 1024:
        tb = min(tb, _round_up((batch + 1) // 2, 8))
    grid = (pl.cdiv(batch, tb),)

    cost = pl.CostEstimate(
        flops=2 * batch * IN_FEATURES * OUT_PAD,          # MXU runs the padded N
        transcendentals=batch * OUT_PAD,                  # 128 exps per row
        bytes_accessed=(batch * IN_FEATURES * 4           # f32 x read
                        + batch * OUT_FEATURES * 4        # f32 10-wide out write
                        + IN_FEATURES * OUT_PAD * 2       # bf16 W
                        + OUT_PAD * 4),                   # f32 bias
    )

    out = pl.pallas_call(
        netlin_kernel,
        out_shape=jax.ShapeDtypeStruct((batch, OUT_FEATURES), jnp.float32),
        grid=grid,
        in_specs=[
            pl.BlockSpec((tb, IN_FEATURES), lambda i: (i, 0)),       # stream x
            pl.BlockSpec((IN_FEATURES, OUT_PAD), lambda i: (0, 0)),  # W resident
            pl.BlockSpec((1, OUT_PAD), lambda i: (0, 0)),            # bias resident
        ],
        out_specs=pl.BlockSpec((tb, OUT_FEATURES), lambda i: (i, 0)),
        compiler_params=pltpu.CompilerParams(
            dimension_semantics=("parallel",),
            # tb=2048 double-buffered f32 x (~12.9 MB) + outputs + W is right at
            # v5e's 16 MiB default scoped VMEM; raise the limit (well under the
            # 64 MiB physical VMEM of v7x, 128 MiB of v5e/v6e).
            vmem_limit_bytes=40 * 1024 * 1024,
        ),
        cost_estimate=cost,
    )(x2d, w_pad, b_pad)

    return out


def init_params(key):
    """Mimics nn.Linear(784, 10) default init (uniform +/- 1/sqrt(784))."""
    kw, kb = jax.random.split(key)
    bound = 1.0 / jnp.sqrt(float(IN_FEATURES))
    # Stored transposed relative to torch (out,in) -> (in,out) so kernel does x @ W.
    w = jax.random.uniform(kw, (IN_FEATURES, OUT_FEATURES), jnp.float32, -bound, bound)
    b = jax.random.uniform(kb, (OUT_FEATURES,), jnp.float32, -bound, bound)
    return w, b


def _reference(x, w, b):
    x2d = x.reshape(x.shape[0], -1)
    return jax.nn.log_softmax(x2d @ w + b, axis=-1)


if __name__ == "__main__":
    key = jax.random.PRNGKey(0)
    k_x, k_p = jax.random.split(key)

    batch = 8
    x = jax.random.normal(k_x, (batch, 1, 28, 28), jnp.float32)  # NCHW MNIST-like
    w, b = init_params(k_p)
    w_pad, b_pad = prepare_params(w, b)

    out = netlin_forward(x, w_pad, b_pad)
    jax.block_until_ready(out)

    assert out.shape == (batch, OUT_FEATURES)

    # log-probs exponentiate-sum to ~1 per row (padded columns contribute 0).
    row_sums = jnp.sum(jnp.exp(out), axis=1)
    assert bool(jnp.all(jnp.abs(row_sums - 1.0) < 1e-4))

    # bf16 matmul inputs + f32 accumulate: agree with f32 reference to ~1e-2.
    ref = _reference(x, w, b)
    assert bool(jnp.max(jnp.abs(out - ref)) < 5e-2)

    print("KERNEL_OK")
</pallas_src>

<mosaic_0001>
module attributes {stable_mosaic.version = 11 : i64} {
  func.func @netlin_kernel(%arg0: i32, %arg1: memref<8x784xf32, #tpu.memory_space<vmem>>, %arg2: memref<784x128xbf16, #tpu.memory_space<vmem>>, %arg3: memref<1x128xf32, #tpu.memory_space<vmem>>, %arg4: memref<8x10xf32, #tpu.memory_space<vmem>>) attributes {dimension_semantics = [#tpu.dimension_semantics<parallel>], iteration_bounds = array<i64: 1>, scalar_prefetch = 0 : i64, scratch_operands = 0 : i64, tpu.core_type = #tpu.core_type<tc>, window_params = [{transform_indices = @transform_0, window_bounds = array<i64: 8, 784>}, {pipeline_mode = #tpu.pipeline_mode<synchronous>, transform_indices = @transform_1, window_bounds = array<i64: 784, 128>}, {pipeline_mode = #tpu.pipeline_mode<synchronous>, transform_indices = @transform_2, window_bounds = array<i64: 1, 128>}, {transform_indices = @transform_3, window_bounds = array<i64: 8, 10>}]} {
    %c0 = arith.constant 0 : index
    %c0_0 = arith.constant 0 : index
    %0 = vector.load %arg1[%c0, %c0_0] : memref<8x784xf32, #tpu.memory_space<vmem>>, vector<8x784xf32>
    %1 = arith.truncf %0 : vector<8x784xf32> to vector<8x784xbf16>
    %c0_1 = arith.constant 0 : index
    %c0_2 = arith.constant 0 : index
    %2 = vector.load %arg2[%c0_1, %c0_2] : memref<784x128xbf16, #tpu.memory_space<vmem>>, vector<784x128xbf16>
    %cst = arith.constant dense<0.000000e+00> : vector<8x128xf32>
    %3 = tpu.matmul %1, %2, %cst {dimension_numbers = #tpu.dot_dimension_numbers<[1], [0], [0], [1], [0, 0, 1, 1], [], []>} : vector<8x784xbf16>, vector<784x128xbf16>, vector<8x128xf32> -> vector<8x128xf32>
    %c0_3 = arith.constant 0 : index
    %c0_4 = arith.constant 0 : index
    %4 = vector.load %arg3[%c0_3, %c0_4] : memref<1x128xf32, #tpu.memory_space<vmem>>, vector<1x128xf32>
    %5 = vector.broadcast %4 : vector<1x128xf32> to vector<8x128xf32>
    %6 = arith.addf %3, %5 : vector<8x128xf32>
    %cst_5 = arith.constant dense<0xFF800000> : vector<8xf32>
    %7 = vector.multi_reduction <maximumf>, %6, %cst_5 [1] : vector<8x128xf32> to vector<8xf32>
    %8 = vector.shape_cast %7 : vector<8xf32> to vector<8x1xf32>
    %9 = vector.broadcast %8 : vector<8x1xf32> to vector<8x128xf32>
    %10 = arith.subf %6, %9 : vector<8x128xf32>
    %11 = math.exp %10 : vector<8x128xf32>
    %cst_6 = arith.constant dense<0.000000e+00> : vector<8xf32>
    %12 = vector.multi_reduction <add>, %11, %cst_6 [1] : vector<8x128xf32> to vector<8xf32>
    %13 = vector.shape_cast %12 : vector<8xf32> to vector<8x1xf32>
    %14 = math.log %13 : vector<8x1xf32>
    %15 = vector.broadcast %14 : vector<8x1xf32> to vector<8x128xf32>
    %16 = arith.subf %10, %15 : vector<8x128xf32>
    %17 = vector.extract_strided_slice %16 {offsets = [0, 0], sizes = [8, 10], strides = [1, 1]} : vector<8x128xf32> to vector<8x10xf32>
    %c0_7 = arith.constant 0 : index
    %c0_8 = arith.constant 0 : index
    %18 = vector.load %arg4[%c0_7, %c0_8] : memref<8x10xf32, #tpu.memory_space<vmem>>, vector<8x10xf32>
    tpu.vector_store %arg4[%c0_7, %c0_8], %17 {strides = array<i32>} : memref<8x10xf32, #tpu.memory_space<vmem>>, vector<8x10xf32>,
    return
  }
  func.func @transform_0(%arg0: i32) -> (i32, i32) {
    %c0_i32 = arith.constant 0 : i32
    %c0_i32_0 = arith.constant 0 : i32
    return %arg0, %c0_i32 : i32, i32
  }
  func.func @transform_1(%arg0: i32) -> (i32, i32) {
    %c0_i32 = arith.constant 0 : i32
    %c0_i32_0 = arith.constant 0 : i32
    %c0_i32_1 = arith.constant 0 : i32
    return %c0_i32, %c0_i32_0 : i32, i32
  }
  func.func @transform_2(%arg0: i32) -> (i32, i32) {
    %c0_i32 = arith.constant 0 : i32
    %c0_i32_0 = arith.constant 0 : i32
    %c0_i32_1 = arith.constant 0 : i32
    return %c0_i32, %c0_i32_0 : i32, i32
  }
  func.func @transform_3(%arg0: i32) -> (i32, i32) {
    %c0_i32 = arith.constant 0 : i32
    %c0_i32_0 = arith.constant 0 : i32
    return %arg0, %c0_i32 : i32, i32
  }
}

</mosaic_0001>

<llo_original>
// kernel: netlin_forward.1
$region0: #{netlin_forward.1}
  #allocation0 [shape = 'u32[]', space=smem, size = 0x4, offset = 0x4, fixed_abs, tag = 'smem constant byte address 0x4 - core index']
  #allocation1 [shape = 'u32[144,128]{1,0:T(1,128)}', space=vmem, size = 0x12000, scoped, tag = 'internal scratch']
  %s0 = inlined_call_operand.vmem [shape: f32[8,784], index: 0, kind: input, shape index: {}]
  %s1 = inlined_call_operand.vmem [shape: bf16[784,128], index: 1, kind: input, shape index: {}]
  %s2 = inlined_call_operand.vmem [shape: f32[1,128], index: 2, kind: input, shape index: {}]
  %s3 = inlined_call_operand.hbm [shape: f32[8,10], index: 3, kind: output, shape index: {}]
  %s4 = sld [smem:[#allocation0]]
  $region22: #{netlin_forward.1} parent=0
    _
  %s6 = ssub.s32 1, %s4
  %s7 = scalar_select 0, %s6, %s4
  $region1: #{netlin_forward.1} parent=0
    #allocation2 [shape = 'u8[4096]{0}', space=vmem, size = 0x1000, scoped, tag = 'output window, operand 0, single buffered']
    #allocation3 [shape = 's32[1]{0}', space=sflag, size = 0x4, scoped, tag = 'scoped memory for netlin_forward.1']
    %8 = vsyncpa [#allocation3], 0
    // Predicated region
    $region2: #{netlin_forward.1} parent=1 // pred_check
      _
    $region3: #{netlin_forward.1} parent=1 // pred_check_branch
      %10 = sbr.rel (0) target = $region5
    $region4: #{netlin_forward.1} parent=1 // pred_region
      _
    $region5: #{netlin_forward.1} parent=1 // pred_fallthru
      _
    // Predicated region
    $region6: #{netlin_forward.1} parent=1 // pred_check
      _
    $region7: #{netlin_forward.1} parent=1 // pred_check_branch
      %12 = sbr.rel (0) target = $region9
    $region8: #{netlin_forward.1} parent=1 // pred_region
      _
    $region9: #{netlin_forward.1} parent=1 // pred_fallthru
      _
    // Predicated region
    $region10: #{netlin_forward.1} parent=1 // pred_check
      _
    $region11: #{netlin_forward.1} parent=1 // pred_check_branch
      %14 = sbr.rel (0) target = $region13
    $region12: #{netlin_forward.1} parent=1 // pred_region
      _
    $region13: #{netlin_forward.1} parent=1 // pred_fallthru
      _
    %v16 = vld [vmem:[%s0] sm:$0xff]
    %v17 = vld [vmem:[%s0 + $0x8] sm:$0xff]
    %v18 = vld [vmem:[%s0 + $0x10] sm:$0xff]
    %v19 = vld [vmem:[%s0 + $0x18] sm:$0xff]
    %v20 = vld [vmem:[%s0 + $0x20] sm:$0xff]
    %v21 = vld [vmem:[%s0 + $0x28] sm:$0xff]
    %v22 = vld [vmem:[%s0 + $0x30] sm:$0xff]
    %v23 = vpack.c.bf16 %v16, %v16
    %v24 = vpack.c.bf16 %v17, %v17
    %v25 = vpack.c.bf16 %v18, %v18
    %v26 = vpack.c.bf16 %v19, %v19
    %v27 = vpack.c.bf16 %v20, %v20
    %v28 = vpack.c.bf16 %v21, %v21
    %v29 = vpack.c.bf16 %v22, %v22
    %v30 = vld [vmem:[%s1] sm:$0xf]
    %v31 = vld [vmem:[%s1 + $0x4] sm:$0xf]
    %v32 = vld [vmem:[%s1 + $0x8] sm:$0xf]
    %v33 = vld [vmem:[%s1 + $0xc] sm:$0xf]
    %v34 = vld [vmem:[%s1 + $0x10] sm:$0xf]
    %v35 = vld [vmem:[%s1 + $0x14] sm:$0xf]
    %v36 = vld [vmem:[%s1 + $0x18] sm:$0xf]
    %v37 = vld [vmem:[%s1 + $0x1c] sm:$0xf]
    %v38 = vld [vmem:[%s1 + $0x20] sm:$0xf]
    %v39 = vld [vmem:[%s1 + $0x24] sm:$0xf]
    %v40 = vld [vmem:[%s1 + $0x28] sm:$0xf]
    %v41 = vld [vmem:[%s1 + $0x2c] sm:$0xf]
    %v42 = vld [vmem:[%s1 + $0x30] sm:$0xf]
    %v43 = vld [vmem:[%s1 + $0x34] sm:$0xf]
    %v44 = vld [vmem:[%s1 + $0x38] sm:$0xf]
    %v45 = vld [vmem:[%s1 + $0x3c] sm:$0xf]
    %v46 = vld [vmem:[%s1 + $0x40] sm:$0xf]
    %v47 = vld [vmem:[%s1 + $0x44] sm:$0xf]
    %v48 = vld [vmem:[%s1 + $0x48] sm:$0xf]
    %v49 = vld [vmem:[%s1 + $0x4c] sm:$0xf]
    %v50 = vld [vmem:[%s1 + $0x50] sm:$0xf]
    %v51 = vld [vmem:[%s1 + $0x54] sm:$0xf]
    %v52 = vld [vmem:[%s1 + $0x58] sm:$0xf]
    %v53 = vld [vmem:[%s1 + $0x5c] sm:$0xf]
    %v54 = vld [vmem:[%s1 + $0x60] sm:$0xf]
    %v55 = vld [vmem:[%s1 + $0x64] sm:$0xf]
    %v56 = vld [vmem:[%s1 + $0x68] sm:$0xf]
    %v57 = vld [vmem:[%s1 + $0x6c] sm:$0xf]
    %v58 = vld [vmem:[%s1 + $0x70] sm:$0xf]
    %v59 = vld [vmem:[%s1 + $0x74] sm:$0xf]
    %v60 = vld [vmem:[%s1 + $0x78] sm:$0xf]
    %v61 = vld [vmem:[%s1 + $0x7c] sm:$0xf]
    %v62 = vld [vmem:[%s1 + $0x80] sm:$0xf]
    %v63 = vld [vmem:[%s1 + $0x84] sm:$0xf]
    %v64 = vld [vmem:[%s1 + $0x88] sm:$0xf]
    %v65 = vld [vmem:[%s1 + $0x8c] sm:$0xf]
    %v66 = vld [vmem:[%s1 + $0x90] sm:$0xf]
    %v67 = vld [vmem:[%s1 + $0x94] sm:$0xf]
    %v68 = vld [vmem:[%s1 + $0x98] sm:$0xf]
    %v69 = vld [vmem:[%s1 + $0x9c] sm:$0xf]
    %v70 = vld [vmem:[%s1 + $0xa0] sm:$0xf]
    %v71 = vld [vmem:[%s1 + $0xa4] sm:$0xf]
    %v72 = vld [vmem:[%s1 + $0xa8] sm:$0xf]
    %v73 = vld [vmem:[%s1 + $0xac] sm:$0xf]
    %v74 = vld [vmem:[%s1 + $0xb0] sm:$0xf]
    %v75 = vld [vmem:[%s1 + $0xb4] sm:$0xf]
    %v76 = vld [vmem:[%s1 + $0xb8] sm:$0xf]
    %v77 = vld [vmem:[%s1 + $0xbc] sm:$0xf]
    %v78 = vld [vmem:[%s1 + $0xc0] sm:$0xf]
    %v79 = vld [vmem:[%s1 + $0xc4] sm:$0xf]
    %v80 = vld [vmem:[%s1 + $0xc8] sm:$0xf]
    %v81 = vld [vmem:[%s1 + $0xcc] sm:$0xf]
    %v82 = vld [vmem:[%s1 + $0xd0] sm:$0xf]
    %v83 = vld [vmem:[%s1 + $0xd4] sm:$0xf]
    %v84 = vld [vmem:[%s1 + $0xd8] sm:$0xf]
    %v85 = vld [vmem:[%s1 + $0xdc] sm:$0xf]
    %v86 = vld [vmem:[%s1 + $0xe0] sm:$0xf]
    %v87 = vld [vmem:[%s1 + $0xe4] sm:$0xf]
    %v88 = vld [vmem:[%s1 + $0xe8] sm:$0xf]
    %v89 = vld [vmem:[%s1 + $0xec] sm:$0xf]
    %v90 = vld [vmem:[%s1 + $0xf0] sm:$0xf]
    %v91 = vld [vmem:[%s1 + $0xf4] sm:$0xf]
    %v92 = vld [vmem:[%s1 + $0xf8] sm:$0xf]
    %v93 = vld [vmem:[%s1 + $0xfc] sm:$0xf]
    %v94 = vld [vmem:[%s1 + $0x100] sm:$0xf]
    %v95 = vld [vmem:[%s1 + $0x104] sm:$0xf]
    %v96 = vld [vmem:[%s1 + $0x108] sm:$0xf]
    %v97 = vld [vmem:[%s1 + $0x10c] sm:$0xf]
    %v98 = vld [vmem:[%s1 + $0x110] sm:$0xf]
    %v99 = vld [vmem:[%s1 + $0x114] sm:$0xf]
    %v100 = vld [vmem:[%s1 + $0x118] sm:$0xf]
    %v101 = vld [vmem:[%s1 + $0x11c] sm:$0xf]
    %v102 = vld [vmem:[%s1 + $0x120] sm:$0xf]
    %v103 = vld [vmem:[%s1 + $0x124] sm:$0xf]
    %v104 = vld [vmem:[%s1 + $0x128] sm:$0xf]
    %v105 = vld [vmem:[%s1 + $0x12c] sm:$0xf]
    %v106 = vld [vmem:[%s1 + $0x130] sm:$0xf]
    %v107 = vld [vmem:[%s1 + $0x134] sm:$0xf]
    %v108 = vld [vmem:[%s1 + $0x138] sm:$0xf]
    %v109 = vld [vmem:[%s1 + $0x13c] sm:$0xf]
    %v110 = vld [vmem:[%s1 + $0x140] sm:$0xf]
    %v111 = vld [vmem:[%s1 + $0x144] sm:$0xf]
    %v112 = vld [vmem:[%s1 + $0x148] sm:$0xf]
    %v113 = vld [vmem:[%s1 + $0x14c] sm:$0xf]
    %v114 = vld [vmem:[%s1 + $0x150] sm:$0xf]
    %v115 = vld [vmem:[%s1 + $0x154] sm:$0xf]
    %v116 = vld [vmem:[%s1 + $0x158] sm:$0xf]
    %v117 = vld [vmem:[%s1 + $0x15c] sm:$0xf]
    %v118 = vld [vmem:[%s1 + $0x160] sm:$0xf]
    %v119 = vld [vmem:[%s1 + $0x164] sm:$0xf]
    %v120 = vld [vmem:[%s1 + $0x168] sm:$0xf]
    %v121 = vld [vmem:[%s1 + $0x16c] sm:$0xf]
    %v122 = vld [vmem:[%s1 + $0x170] sm:$0xf]
    %v123 = vld [vmem:[%s1 + $0x174] sm:$0xf]
    %v124 = vld [vmem:[%s1 + $0x178] sm:$0xf]
    %v125 = vld [vmem:[%s1 + $0x17c] sm:$0xf]
    %v126 = vld [vmem:[%s1 + $0x180] sm:$0xf]
    %v127 = vld [vmem:[%s1 + $0x184] sm:$0xf]
    %v128 = vld [vmem:[%s2] sm:$0x1]
    %v130 = vlaneseq
    %v131 = vshrl.u32 %v130, 7
    %v132 = vsub.s32 0, %v131
    %v133 = vrot.slane %v128, %v132
    %v233 = vunpack.c.l.b16 %v30
    %v234 = vunpack.c.l.b16 %v31
    %v235 = vunpack.c.l.b16 %v32
    %v236 = vunpack.c.l.b16 %v33
    %v237 = vunpack.c.l.b16 %v34
    %v238 = vunpack.c.l.b16 %v35
    %v239 = vunpack.c.l.b16 %v36
    %v240 = vunpack.c.l.b16 %v37
    %v241 = vunpack.c.l.b16 %v38
    %v242 = vunpack.c.l.b16 %v39
    %v243 = vunpack.c.l.b16 %v40
    %v244 = vunpack.c.l.b16 %v41
    %v245 = vunpack.c.l.b16 %v42
    %v246 = vunpack.c.l.b16 %v43
    %v247 = vunpack.c.l.b16 %v44
    %v248 = vunpack.c.l.b16 %v45
    %v249 = vunpack.c.l.b16 %v46
    %v250 = vunpack.c.l.b16 %v47
    %v251 = vunpack.c.l.b16 %v48
    %v252 = vunpack.c.l.b16 %v49
    %v253 = vunpack.c.l.b16 %v50
    %v254 = vunpack.c.l.b16 %v51
    %v255 = vunpack.c.l.b16 %v52
    %v256 = vunpack.c.l.b16 %v53
    %v257 = vunpack.c.l.b16 %v54
    %v258 = vunpack.c.l.b16 %v55
    %v259 = vunpack.c.l.b16 %v56
    %v260 = vunpack.c.l.b16 %v57
    %v261 = vunpack.c.l.b16 %v58
    %v262 = vunpack.c.l.b16 %v59
    %v263 = vunpack.c.l.b16 %v60
    %v264 = vunpack.c.l.b16 %v61
    %v265 = vunpack.c.l.b16 %v62
    %v266 = vunpack.c.l.b16 %v63
    %v267 = vunpack.c.l.b16 %v64
    %v268 = vunpack.c.l.b16 %v65
    %v269 = vunpack.c.l.b16 %v66
    %v270 = vunpack.c.l.b16 %v67
    %v271 = vunpack.c.l.b16 %v68
    %v272 = vunpack.c.l.b16 %v69
    %v273 = vunpack.c.l.b16 %v70
    %v274 = vunpack.c.l.b16 %v71
    %v275 = vunpack.c.l.b16 %v72
    %v276 = vunpack.c.l.b16 %v73
    %v277 = vunpack.c.l.b16 %v74
    %v278 = vunpack.c.l.b16 %v75
    %v279 = vunpack.c.l.b16 %v76
    %v280 = vunpack.c.l.b16 %v77
    %v281 = vunpack.c.l.b16 %v78
    %v282 = vunpack.c.l.b16 %v79
    %v283 = vunpack.c.l.b16 %v80
    %v284 = vunpack.c.l.b16 %v81
    %v285 = vunpack.c.l.b16 %v82
    %v286 = vunpack.c.l.b16 %v83
    %v287 = vunpack.c.l.b16 %v84
    %v288 = vunpack.c.l.b16 %v85
    %v289 = vunpack.c.l.b16 %v86
    %v290 = vunpack.c.l.b16 %v87
    %v291 = vunpack.c.l.b16 %v88
    %v292 = vunpack.c.l.b16 %v89
    %v293 = vunpack.c.l.b16 %v90
    %v294 = vunpack.c.l.b16 %v91
    %v295 = vunpack.c.l.b16 %v92
    %v296 = vunpack.c.l.b16 %v93
    %v297 = vunpack.c.l.b16 %v94
    %v298 = vunpack.c.l.b16 %v95
    %v299 = vunpack.c.l.b16 %v96
    %v300 = vunpack.c.l.b16 %v97
    %v301 = vunpack.c.l.b16 %v98
    %v302 = vunpack.c.l.b16 %v99
    %v303 = vunpack.c.l.b16 %v100
    %v304 = vunpack.c.l.b16 %v101
    %v305 = vunpack.c.l.b16 %v102
    %v306 = vunpack.c.l.b16 %v103
    %v307 = vunpack.c.l.b16 %v104
    %v308 = vunpack.c.l.b16 %v105
    %v309 = vunpack.c.l.b16 %v106
    %v310 = vunpack.c.l.b16 %v107
    %v311 = vunpack.c.l.b16 %v108
    %v312 = vunpack.c.l.b16 %v109
    %v313 = vunpack.c.l.b16 %v110
    %v314 = vunpack.c.l.b16 %v111
    %v315 = vunpack.c.l.b16 %v112
    %v316 = vunpack.c.l.b16 %v113
    %v317 = vunpack.c.l.b16 %v114
    %v318 = vunpack.c.l.b16 %v115
    %v319 = vunpack.c.l.b16 %v116
    %v320 = vunpack.c.l.b16 %v117
    %v321 = vunpack.c.l.b16 %v118
    %v322 = vunpack.c.l.b16 %v119
    %v323 = vunpack.c.l.b16 %v120
    %v324 = vunpack.c.l.b16 %v121
    %v325 = vunpack.c.l.b16 %v122
    %v326 = vunpack.c.l.b16 %v123
    %v327 = vunpack.c.l.b16 %v124
    %v328 = vunpack.c.l.b16 %v125
    %v329 = vunpack.c.l.b16 %v126
    %v330 = vunpack.c.l.b16 %v127
    %v331 = vpack.c.b16 %v234, %v233
    %v332 = vpack.c.b16 %v236, %v235
    %v333 = vpack.c.b16 %v238, %v237
    %v334 = vpack.c.b16 %v240, %v239
    %v335 = vpack.c.b16 %v242, %v241
    %v336 = vpack.c.b16 %v244, %v243
    %v337 = vpack.c.b16 %v246, %v245
    %v338 = vpack.c.b16 %v248, %v247
    %v339 = vpack.c.b16 %v250, %v249
    %v340 = vpack.c.b16 %v252, %v251
    %v341 = vpack.c.b16 %v254, %v253
    %v342 = vpack.c.b16 %v256, %v255
    %v343 = vpack.c.b16 %v258, %v257
    %v344 = vpack.c.b16 %v260, %v259
    %v345 = vpack.c.b16 %v262, %v261
    %v346 = vpack.c.b16 %v264, %v263
    %v347 = vpack.c.b16 %v266, %v265
    %v348 = vpack.c.b16 %v268, %v267
    %v349 = vpack.c.b16 %v270, %v269
    %v350 = vpack.c.b16 %v272, %v271
    %v351 = vpack.c.b16 %v274, %v273
    %v352 = vpack.c.b16 %v276, %v275
    %v353 = vpack.c.b16 %v278, %v277
    %v354 = vpack.c.b16 %v280, %v279
    %v355 = vpack.c.b16 %v282, %v281
    %v356 = vpack.c.b16 %v284, %v283
    %v357 = vpack.c.b16 %v286, %v285
    %v358 = vpack.c.b16 %v288, %v287
    %v359 = vpack.c.b16 %v290, %v289
    %v360 = vpack.c.b16 %v292, %v291
    %v361 = vpack.c.b16 %v294, %v293
    %v362 = vpack.c.b16 %v296, %v295
    %v363 = vpack.c.b16 %v298, %v297
    %v364 = vpack.c.b16 %v300, %v299
    %v365 = vpack.c.b16 %v302, %v301
    %v366 = vpack.c.b16 %v304, %v303
    %v367 = vpack.c.b16 %v306, %v305
    %v368 = vpack.c.b16 %v308, %v307
    %v369 = vpack.c.b16 %v310, %v309
    %v370 = vpack.c.b16 %v312, %v311
    %v371 = vpack.c.b16 %v314, %v313
    %v372 = vpack.c.b16 %v316, %v315
    %v373 = vpack.c.b16 %v318, %v317
    %v374 = vpack.c.b16 %v320, %v319
    %v375 = vpack.c.b16 %v322, %v321
    %v376 = vpack.c.b16 %v324, %v323
    %v377 = vpack.c.b16 %v326, %v325
    %v378 = vpack.c.b16 %v328, %v327
    %v379 = vpack.c.b16 %v330, %v329
    %vm429 = vcmask 130048
    %v431 = vsel %vm429, %v29, 0
    %433 = vmatprep.subr.bf16.mxu0 0
    %434 = vmatpush1.bf16.msra.mxu0 %v338
    %435 = vmatprep.subr.bf16.mxu0 0
    %436 = vmatpush1.bf16.msra.mxu0 %v337
    %437 = vmatprep.subr.bf16.mxu0 0
    %438 = vmatpush1.bf16.msra.mxu0 %v336
    %439 = vmatprep.subr.bf16.mxu0 0
    %440 = vmatpush1.bf16.msra.mxu0 %v335
    %441 = vmatprep.subr.bf16.mxu0 0
    %442 = vmatpush1.bf16.msra.mxu0 %v334
    %443 = vmatprep.subr.bf16.mxu0 0
    %444 = vmatpush1.bf16.msra.mxu0 %v333
    %445 = vmatprep.subr.bf16.mxu0 0
    %446 = vmatpush1.bf16.msra.mxu0 %v332
    %447 = vmatprep.subr.bf16.mxu0 0
    %448 = vmatpush1.bf16.msra.mxu0 %v331
    %449 = vmatprep.subr.bf16.mxu0 0
    %450 = vmatpush2.bf16.msra.mxu0 %v346
    %451 = vmatprep.subr.bf16.mxu0 0
    %452 = vmatpush2.bf16.msra.mxu0 %v345
    %453 = vmatprep.subr.bf16.mxu0 0
    %454 = vmatpush2.bf16.msra.mxu0 %v344
    %455 = vmatprep.subr.bf16.mxu0 0
    %456 = vmatpush2.bf16.msra.mxu0 %v343
    %457 = vmatprep.subr.bf16.mxu0 0
    %458 = vmatpush2.bf16.msra.mxu0 %v342
    %459 = vmatprep.subr.bf16.mxu0 0
    %460 = vmatpush2.bf16.msra.mxu0 %v341
    %461 = vmatprep.subr.bf16.mxu0 0
    %462 = vmatpush2.bf16.msra.mxu0 %v340
    %463 = vmatprep.subr.bf16.mxu0 0
    %464 = vmatpush2.bf16.msra.mxu0 %v339
    %465 = vmatprep.mubr.bf16.mxu0 %v24
    %466 = vmatmul.mubr.bf16.gmra.mxu0 %v23
    %v467 = vpop.f32.mrf.mxu0
    %v468 = vadd.f32 %v133, %v467
    %v469 = vpop.f32.mrf.mxu0
    %v470 = vpop.f32.mrf.mxu0
    %v471 = vpop.f32.mrf.mxu0
    %472 = vdwg.mxu0
    %473 = vmatprep.subr.bf16.mxu0 0
    %474 = vmatpush1.bf16.msra.mxu0 %v354
    %475 = vmatprep.subr.bf16.mxu0 0
    %476 = vmatpush1.bf16.msra.mxu0 %v353
    %477 = vmatprep.subr.bf16.mxu0 0
    %478 = vmatpush1.bf16.msra.mxu0 %v352
    %479 = vmatprep.subr.bf16.mxu0 0
    %480 = vmatpush1.bf16.msra.mxu0 %v351
    %481 = vmatprep.subr.bf16.mxu0 0
    %482 = vmatpush1.bf16.msra.mxu0 %v350
    %483 = vmatprep.subr.bf16.mxu0 0
    %484 = vmatpush1.bf16.msra.mxu0 %v349
    %485 = vmatprep.subr.bf16.mxu0 0
    %486 = vmatpush1.bf16.msra.mxu0 %v348
    %487 = vmatprep.subr.bf16.mxu0 0
    %488 = vmatpush1.bf16.msra.mxu0 %v347
    %489 = vmatprep.subr.bf16.mxu0 0
    %490 = vmatpush2.bf16.msra.mxu0 %v362
    %491 = vmatprep.subr.bf16.mxu0 0
    %492 = vmatpush2.bf16.msra.mxu0 %v361
    %493 = vmatprep.subr.bf16.mxu0 0
    %494 = vmatpush2.bf16.msra.mxu0 %v360
    %495 = vmatprep.subr.bf16.mxu0 0
    %496 = vmatpush2.bf16.msra.mxu0 %v359
    %497 = vmatprep.subr.bf16.mxu0 0
    %498 = vmatpush2.bf16.msra.mxu0 %v358
    %499 = vmatprep.subr.bf16.mxu0 0
    %500 = vmatpush2.bf16.msra.mxu0 %v357
    %501 = vmatprep.subr.bf16.mxu0 0
    %502 = vmatpush2.bf16.msra.mxu0 %v356
    %503 = vmatprep.subr.bf16.mxu0 0
    %504 = vmatpush2.bf16.msra.mxu0 %v355
    %505 = vmatprep.mubr.bf16.mxu0 %v26
    %506 = vmatmul.mubr.bf16.gmra.mxu0 %v25
    %v507 = vpop.f32.mrf.mxu0
    %v508 = vadd.f32 %v468, %v507
    %v509 = vpop.f32.mrf.mxu0
    %v510 = vpop.f32.mrf.mxu0
    %v511 = vpop.f32.mrf.mxu0
    %512 = vdwg.mxu0
    %513 = vmatprep.subr.bf16.mxu0 0
    %514 = vmatpush1.bf16.msra.mxu0 %v370
    %515 = vmatprep.subr.bf16.mxu0 0
    %516 = vmatpush1.bf16.msra.mxu0 %v369
    %517 = vmatprep.subr.bf16.mxu0 0
    %518 = vmatpush1.bf16.msra.mxu0 %v368
    %519 = vmatprep.subr.bf16.mxu0 0
    %520 = vmatpush1.bf16.msra.mxu0 %v367
    %521 = vmatprep.subr.bf16.mxu0 0
    %522 = vmatpush1.bf16.msra.mxu0 %v366
    %523 = vmatprep.subr.bf16.mxu0 0
    %524 = vmatpush1.bf16.msra.mxu0 %v365
    %525 = vmatprep.subr.bf16.mxu0 0
    %526 = vmatpush1.bf16.msra.mxu0 %v364
    %527 = vmatprep.subr.bf16.mxu0 0
    %528 = vmatpush1.bf16.msra.mxu0 %v363
    %529 = vmatprep.subr.bf16.mxu0 0
    %530 = vmatpush2.bf16.msra.mxu0 %v378
    %531 = vmatprep.subr.bf16.mxu0 0
    %532 = vmatpush2.bf16.msra.mxu0 %v377
    %533 = vmatprep.subr.bf16.mxu0 0
    %534 = vmatpush2.bf16.msra.mxu0 %v376
    %535 = vmatprep.subr.bf16.mxu0 0
    %536 = vmatpush2.bf16.msra.mxu0 %v375
    %537 = vmatprep.subr.bf16.mxu0 0
    %538 = vmatpush2.bf16.msra.mxu0 %v374
    %539 = vmatprep.subr.bf16.mxu0 0
    %540 = vmatpush2.bf16.msra.mxu0 %v373
    %541 = vmatprep.subr.bf16.mxu0 0
    %542 = vmatpush2.bf16.msra.mxu0 %v372
    %543 = vmatprep.subr.bf16.mxu0 0
    %544 = vmatpush2.bf16.msra.mxu0 %v371
    %545 = vmatprep.mubr.bf16.mxu0 %v28
    %546 = vmatmul.mubr.bf16.gmra.mxu0 %v27
    %v547 = vpop.f32.mrf.mxu0
    %v548 = vadd.f32 %v508, %v547
    %v549 = vpop.f32.mrf.mxu0
    %v550 = vpop.f32.mrf.mxu0
    %v551 = vpop.f32.mrf.mxu0
    %552 = vdwg.mxu0
    %553 = vmatprep.subr.bf16.mxu0 0
    %554 = vmatpush1.bf16.msra.mxu0 0
    %555 = vmatprep.subr.bf16.mxu0 0
    %556 = vmatpush1.bf16.msra.mxu0 0
    %557 = vmatprep.subr.bf16.mxu0 0
    %558 = vmatpush1.bf16.msra.mxu0 0
    %559 = vmatprep.subr.bf16.mxu0 0
    %560 = vmatpush1.bf16.msra.mxu0 0
    %561 = vmatprep.subr.bf16.mxu0 0
    %562 = vmatpush1.bf16.msra.mxu0 0
    %563 = vmatprep.subr.bf16.mxu0 0
    %564 = vmatpush1.bf16.msra.mxu0 0
    %565 = vmatprep.subr.bf16.mxu0 0
    %566 = vmatpush1.bf16.msra.mxu0 0
    %567 = vmatprep.subr.bf16.mxu0 0
    %568 = vmatpush1.bf16.msra.mxu0 %v379
    %569 = vmatprep.subr.bf16.mxu0 0
    %570 = vmatpush2.bf16.msra.mxu0 0
    %571 = vmatprep.subr.bf16.mxu0 0
    %572 = vmatpush2.bf16.msra.mxu0 0
    %573 = vmatprep.subr.bf16.mxu0 0
    %574 = vmatpush2.bf16.msra.mxu0 0
    %575 = vmatprep.subr.bf16.mxu0 0
    %576 = vmatpush2.bf16.msra.mxu0 0
    %577 = vmatprep.subr.bf16.mxu0 0
    %578 = vmatpush2.bf16.msra.mxu0 0
    %579 = vmatprep.subr.bf16.mxu0 0
    %580 = vmatpush2.bf16.msra.mxu0 0
    %581 = vmatprep.subr.bf16.mxu0 0
    %582 = vmatpush2.bf16.msra.mxu0 0
    %583 = vmatprep.subr.bf16.mxu0 0
    %584 = vmatpush2.bf16.msra.mxu0 0
    %585 = vmatprep.mubr.bf16.mxu0 0
    %586 = vmatmul.mubr.bf16.gmra.mxu0 %v431
    %v587 = vpop.f32.mrf.mxu0
    %v588 = vadd.f32 %v548, %v587
    %v589 = vpop.f32.mrf.mxu0
    %v590 = vpop.f32.mrf.mxu0
    %v591 = vpop.f32.mrf.mxu0
    %592 = vdwg.mxu0
    %593 = vmax.xlane.f32.xlu0 %v588
    %v594 = vpop.xlane.xlu0 %593
    %v595 = vsub.f32 %v588, %v594
    %v596 = vmul.f32 %v595, 1.442695
    %v597 = vpow.pop %v596
    %598 = vadd.xlane.f32.xlu0 %v597
    %v599 = vpop.xlane.xlu0 %598
    %v600 = vlog2.pop %v599
    %v601 = vmul.f32 %v600, 0.6931472
    %v602 = vsub.f32 %v595, %v601
    %vm603 = vcmask 80896
    %604 = vst.msk [vmem:[#allocation2] sm:$0xff] %vm603, %v602
    // Predicated region
    $region14: #{netlin_forward.1} parent=1 // pred_check
      _
    $region15: #{netlin_forward.1} parent=1 // pred_check_branch
      %606 = sbr.rel (0) target = $region17
    $region16: #{netlin_forward.1} parent=1 // pred_region
      %s608 = ssub.s32 128, 128
      %609 = vsyncadd [#allocation3], %s608
      %s611 = sshll.u32 [#allocation2], 4
      %s612 = int_to_ptr.vmem [resolvable:$true] %s611
      %614 = dma.vmem_to_hbm [thread:$0]  %s612, 128, %s3, [#allocation3]
    $region17: #{netlin_forward.1} parent=1 // pred_fallthru
      _
    // Predicated region
    $region18: #{netlin_forward.1} parent=1 // pred_check
      _
    $region19: #{netlin_forward.1} parent=1 // pred_check_branch
      %616 = sbr.rel (0) target = $region21
    $region20: #{netlin_forward.1} parent=1 // pred_region
      %617 = dma.done [#allocation3], 128
    $region21: #{netlin_forward.1} parent=1 // pred_fallthru
      _
    %618 = vsyncpa [#allocation3], 1

</llo_original>
